<compile_context>
chip_gen: v5e
topology: v5e:2x2
jax: 0.10.0
libtpu: 0.0.40
codegen_flags: <defaults>
</compile_context>

<pallas_src>
import numpy as np
import jax
import jax.numpy as jnp
from jax import lax
from jax.experimental import pallas as pl
from jax.experimental.pallas import tpu as pltpu

# (kernel_size, dilation, symmetric 'same' pad) for conv1..conv4
BRANCHES = (
    (1, 1, 0),
    (3, 2, 2),
    (5, 3, 6),
    (7, 3, 9),
)
MAX_PAD = 9          # conv4: dilation 3 * (7-1) / 2
NEG_SLOPE = 0.01     # nn.LeakyReLU() default


def _union_taps():
    """Union of all branches' tap offsets into the MAX_PAD-padded input
    (offsets for output-pixel parity (0, 0); other parities are a +1 shift)."""
    taps = set()
    for K, d, p in BRANCHES:
        off = MAX_PAD - p
        for kh in range(K):
            for kw in range(K):
                taps.add((off + kh * d, off + kw * d))
    return tuple(sorted(taps))


TAPS = _union_taps()     # 57 distinct (row, col) tap offsets
T = len(TAPS)


# --------------------------------------------------------------------------
# Pallas kernel: fused (im2col GEMM + bias) + LeakyReLU + (maxpool + avgpool)
# --------------------------------------------------------------------------
def _encoder_conv_kernel(x_ref, w_ref, out_ref):
    """x_ref : (1, 4, ts, TCp) bf16 — im2col LHS per 2x2 parity; column TC is a
                constant 1.0 (bias column), columns > TC are zero padding.
       w_ref : (TCp, Cout)     bf16 — fused weights; row TC holds the biases.
       out_ref: (1, ts, Cout)  f32  — pooled output (flat spatial tile)."""
    _, npar, ts, k = x_ref.shape
    w = w_ref[...]
    x = x_ref[0]

    if ts % 8 == 0:
        # Single fused MXU matmul over all four parities (better push/drain
        # cadence than 4 small dots); bias arrives via ones-column x bias-row.
        y = jnp.dot(x.reshape(npar * ts, k), w,
                    preferred_element_type=jnp.float32)
        y = jnp.where(y >= 0, y, NEG_SLOPE * y)          # LeakyReLU
        y = y.reshape(npar, ts, -1)
        mx = jnp.max(y, axis=0)
        sm = jnp.sum(y, axis=0)
    else:
        # Rare fallback (ts == S not a multiple of 8): per-parity dots with
        # running max / sum accumulators (avoids sublane-misaligned reshape).
        def branch(p):
            yp = jnp.dot(x[p], w, preferred_element_type=jnp.float32)
            return jnp.where(yp >= 0, yp, NEG_SLOPE * yp)
        y0 = branch(0)
        mx, sm = y0, y0
        for p in range(1, npar):
            yp = branch(p)
            mx = jnp.maximum(mx, yp)
            sm = sm + yp

    # maxpool + avgpool over the 2x2 window (= the 4 parities), single
    # lane-dense store of the whole channel block.
    out_ref[0] = (mx + 0.25 * sm).astype(out_ref.dtype)


# --------------------------------------------------------------------------
# VMEM-aware tile selection
# --------------------------------------------------------------------------
def _vmem_capacity_bytes():
    try:
        cap = getattr(pltpu.get_tpu_info(), "vmem_capacity_bytes", None)
        if cap:
            return int(cap)
    except Exception:
        pass
    return 64 << 20          # conservative fallback (v7x per-core VMEM)


def _tile_footprint(ts, TCp, Cout):
    lhs = 2 * (4 * ts * TCp * 2)       # double-buffered bf16 LHS block
    lhsv = 4 * ts * TCp * 2            # possible in-kernel LHS value copy
    wgt = 2 * (TCp * Cout * 2)         # resident bf16 weight
    outb = 2 * (ts * Cout * 4)         # double-buffered f32 output block
    inter = 2 * (4 * ts * Cout * 4)    # f32 GEMM result + pooling temporaries
    return lhs + lhsv + wgt + outb + inter + (2 << 20)   # + headroom


def _pick_tile(S, TCp, Cout, N, vmem_cap):
    """Largest spatial tile (multiple of 16 preferred, dividing S) whose
    pipelined footprint fits ~55% of physical VMEM; keeps >= 2 grid points
    when possible so v7x's two TensorCores both get work."""
    budget = int(0.55 * vmem_cap)
    for mult in (16, 8):
        cands = [t for t in range(mult, S + 1, mult)
                 if S % t == 0 and _tile_footprint(t, TCp, Cout) <= budget]
        if cands:
            ts = max(cands)
            if N * (S // ts) < 2:                 # load-balance across 2 TCs
                two = [t for t in cands if S // t >= 2]
                if two:
                    ts = max(two)
            return ts
    # No aligned divisor fits the budget: fall back to the full extent (the
    # (8,128) rule allows a block dim equal to the array dim) — but never
    # silently exceed physical VMEM.
    if _tile_footprint(S, TCp, Cout) > vmem_cap:
        raise ValueError(
            f"encoder_conv: spatial extent {S} has no VMEM-fitting "
            f"multiple-of-8 divisor; a masked-tail grid would be required.")
    return S


# --------------------------------------------------------------------------
# Public wrapper (NCHW in / NCHW out, matching the PyTorch module)
# --------------------------------------------------------------------------
@jax.jit
def encoder_conv_forward(x_nchw, params):
    N, Cin, H, W = x_nchw.shape
    assert H % 2 == 0 and W % 2 == 0
    Coc = params["w1"].shape[-1]
    Cout = 4 * Coc
    Ho, Wo = H // 2, W // 2
    S = Ho * Wo
    TC = T * Cin
    TCp = ((TC + 1 + 127) // 128) * 128      # +1 bias col, K padded to 128-mult

    # ---- layout plumbing (wrapper glue, plain JAX) -------------------------
    # Cast to bf16 BEFORE the 57-tap gather: halves the glue HBM traffic.
    x = jnp.transpose(x_nchw, (0, 2, 3, 1)).astype(jnp.bfloat16)   # NHWC bf16
    P = MAX_PAD
    xpad = jnp.pad(x, ((0, 0), (P, P), (P, P), (0, 0)))
    # Pre-shifted / pre-flattened im2col LHS, one slab per output-pixel parity:
    # element (oh, ow, tap, cin) = xpad[2*oh + ph + r, 2*ow + pw + c, cin].
    lhs = []
    for ph in range(2):
        for pw in range(2):
            slabs = [xpad[:, r + ph:r + ph + 2 * Ho:2,
                            c + pw:c + pw + 2 * Wo:2, :]
                     for (r, c) in TAPS]
            lhs.append(jnp.concatenate(slabs, axis=-1).reshape(N, S, TC))
    xim = jnp.stack(lhs, axis=1)                                    # (N,4,S,TC)
    # Bias column (constant 1.0) + zero padding up to the 128-aligned K.
    ones = jnp.ones((N, 4, S, 1), jnp.bfloat16)
    xim = jnp.concatenate([xim, ones], axis=-1)
    xim = jnp.pad(xim, ((0, 0), (0, 0), (0, 0), (0, TCp - TC - 1)))

    # Fused weight: rows = (union tap, cin); cols = [conv1|conv2|conv3|conv4];
    # row TC = concatenated biases (matches the ones-column); rows > TC = 0.
    tap_idx = {t: i for i, t in enumerate(TAPS)}
    Wf = jnp.zeros((TC, Cout), jnp.float32)
    for b, (K, d, p) in enumerate(BRANCHES):
        off = MAX_PAD - p
        wb = params[f"w{b + 1}"]                                  # (K,K,Cin,Coc)
        for kh in range(K):
            for kw in range(K):
                ti = tap_idx[(off + kh * d, off + kw * d)]
                Wf = Wf.at[ti * Cin:(ti + 1) * Cin,
                           b * Coc:(b + 1) * Coc].set(wb[kh, kw])
    bias = jnp.concatenate([params[f"b{i}"] for i in range(1, 5)])
    Wf = jnp.concatenate([Wf, bias[None, :]], axis=0)
    Wf = jnp.pad(Wf, ((0, TCp - TC - 1), (0, 0))).astype(jnp.bfloat16)

    # ---- pallas_call -------------------------------------------------------
    vmem_cap = _vmem_capacity_bytes()
    ts = _pick_tile(S, TCp, Cout, N, vmem_cap)
    grid = (N, S // ts)
    footprint = _tile_footprint(ts, TCp, Cout)
    # <= ~75% of physical VMEM (48 MiB on v7x) leaves room for compiler scratch.
    vmem_limit = int(min(0.75 * vmem_cap, max(32 << 20, 1.5 * footprint)))

    out = pl.pallas_call(
        _encoder_conv_kernel,
        out_shape=jax.ShapeDtypeStruct((N, S, Cout), jnp.float32),
        grid=grid,
        in_specs=[
            # NOTE: if the LHS DMA ever shows up as exposed latency, add
            # pipeline_mode=pl.Buffered(3) here and sweep depth 2 vs 3.
            pl.BlockSpec((1, 4, ts, TCp), lambda n, i: (n, 0, i, 0)),
            pl.BlockSpec((TCp, Cout), lambda n, i: (0, 0)),   # resident weight
        ],
        out_specs=pl.BlockSpec((1, ts, Cout), lambda n, i: (n, i, 0)),
        compiler_params=pltpu.CompilerParams(
            dimension_semantics=("parallel", "parallel"),
            vmem_limit_bytes=vmem_limit,
        ),
    )(xim, Wf)

    out = out.reshape(N, Ho, Wo, Cout)
    return jnp.transpose(out, (0, 3, 1, 2))                       # NCHW


# --------------------------------------------------------------------------
# Parameters and pure-JAX reference
# --------------------------------------------------------------------------
def init_params(key, in_chs, out_chs, dtype=jnp.float32):
    """Deterministic synthetic parameters (PyTorch Conv2d-like uniform init)."""
    assert out_chs % 4 == 0
    Coc = out_chs // 4
    params = {}
    for i, (K, d, p) in enumerate(BRANCHES, start=1):
        key, kw, kb = jax.random.split(key, 3)
        bound = 1.0 / np.sqrt(in_chs * K * K)
        params[f"w{i}"] = jax.random.uniform(kw, (K, K, in_chs, Coc), dtype,
                                             -bound, bound)       # HWIO
        params[f"b{i}"] = jax.random.uniform(kb, (Coc,), dtype, -bound, bound)
    return params


def ref_forward(x_nchw, params):
    """Pure-JAX f32 reference (matches PyTorch semantics)."""
    x = jnp.transpose(x_nchw, (0, 2, 3, 1))
    outs = []
    for i, (K, d, p) in enumerate(BRANCHES, start=1):
        y = lax.conv_general_dilated(
            x, params[f"w{i}"], window_strides=(1, 1),
            padding=[(p, p), (p, p)], rhs_dilation=(d, d),
            dimension_numbers=("NHWC", "HWIO", "NHWC"))
        y = y + params[f"b{i}"]
        y = jnp.where(y >= 0, y, NEG_SLOPE * y)
        outs.append(y)
    xo = jnp.concatenate(outs, axis=-1)
    N, H, W, C = xo.shape
    xr = xo.reshape(N, H // 2, 2, W // 2, 2, C)
    pooled = xr.max(axis=(2, 4)) + xr.mean(axis=(2, 4))
    return jnp.transpose(pooled, (0, 3, 1, 2))


if __name__ == "__main__":
    key = jax.random.PRNGKey(0)
    kx, kp = jax.random.split(key)

    N, in_chs, out_chs, H, W = 2, 4, 8, 16, 16
    x = jax.random.normal(kx, (N, in_chs, H, W), jnp.float32)
    params = init_params(kp, in_chs, out_chs)

    out = jax.block_until_ready(encoder_conv_forward(x, params))
    assert out.shape == (N, out_chs, H // 2, W // 2), out.shape

    ref = jax.block_until_ready(ref_forward(x, params))
    # bf16 MXU operands (f32 accumulation) -> slightly looser tolerance.
    np.testing.assert_allclose(np.asarray(out), np.asarray(ref),
                               atol=2e-2, rtol=2e-2)
    print("KERNEL_OK")
</pallas_src>

<mosaic_0001>
module attributes {stable_mosaic.version = 11 : i64} {
  func.func @_encoder_conv_kernel(%arg0: i32, %arg1: i32, %arg2: memref<1x4x64x256xbf16, #tpu.memory_space<vmem>>, %arg3: memref<256x8xbf16, #tpu.memory_space<vmem>>, %arg4: memref<1x64x8xf32, #tpu.memory_space<vmem>>) attributes {dimension_semantics = [#tpu.dimension_semantics<parallel>, #tpu.dimension_semantics<parallel>], iteration_bounds = array<i64: 2, 1>, scalar_prefetch = 0 : i64, scratch_operands = 0 : i64, tpu.core_type = #tpu.core_type<tc>, window_params = [{transform_indices = @transform_0, window_bounds = array<i64: 1, 4, 64, 256>}, {pipeline_mode = #tpu.pipeline_mode<synchronous>, transform_indices = @transform_1, window_bounds = array<i64: 256, 8>}, {transform_indices = @transform_2, window_bounds = array<i64: 1, 64, 8>}]} {
    %c0 = arith.constant 0 : index
    %c0_0 = arith.constant 0 : index
    %0 = vector.load %arg3[%c0, %c0_0] : memref<256x8xbf16, #tpu.memory_space<vmem>>, vector<256x8xbf16>
    %c0_1 = arith.constant 0 : index
    %c0_2 = arith.constant 0 : index
    %c0_3 = arith.constant 0 : index
    %c0_4 = arith.constant 0 : index
    %1 = vector.load %arg2[%c0_1, %c0_2, %c0_3, %c0_4] : memref<1x4x64x256xbf16, #tpu.memory_space<vmem>>, vector<1x4x64x256xbf16>
    %2 = vector.shape_cast %1 : vector<1x4x64x256xbf16> to vector<4x64x256xbf16>
    %3 = vector.shape_cast %2 : vector<4x64x256xbf16> to vector<256x256xbf16>
    %cst = arith.constant dense<0.000000e+00> : vector<256x8xf32>
    %4 = tpu.matmul %3, %0, %cst {dimension_numbers = #tpu.dot_dimension_numbers<[1], [0], [0], [1], [0, 0, 1, 1], [], []>} : vector<256x256xbf16>, vector<256x8xbf16>, vector<256x8xf32> -> vector<256x8xf32>
    %cst_5 = arith.constant 0.000000e+00 : f32
    %5 = vector.broadcast %cst_5 : f32 to vector<256x8xf32>
    %6 = arith.cmpf oge, %4, %5 : vector<256x8xf32>
    %cst_6 = arith.constant 0.00999999977 : f32
    %7 = vector.broadcast %cst_6 : f32 to vector<256x8xf32>
    %8 = arith.mulf %7, %4 : vector<256x8xf32>
    %9 = arith.select %6, %4, %8 : vector<256x8xi1>, vector<256x8xf32>
    %10 = vector.shape_cast %9 : vector<256x8xf32> to vector<4x64x8xf32>
    %cst_7 = arith.constant dense<0xFF800000> : vector<64x8xf32>
    %11 = vector.multi_reduction <maximumf>, %10, %cst_7 [0] : vector<4x64x8xf32> to vector<64x8xf32>
    %cst_8 = arith.constant dense<0.000000e+00> : vector<64x8xf32>
    %12 = vector.multi_reduction <add>, %10, %cst_8 [0] : vector<4x64x8xf32> to vector<64x8xf32>
    %cst_9 = arith.constant 2.500000e-01 : f32
    %13 = vector.broadcast %cst_9 : f32 to vector<64x8xf32>
    %14 = arith.mulf %13, %12 : vector<64x8xf32>
    %15 = arith.addf %11, %14 : vector<64x8xf32>
    %c0_10 = arith.constant 0 : index
    %c0_11 = arith.constant 0 : index
    %c0_12 = arith.constant 0 : index
    %16 = vector.load %arg4[%c0_10, %c0_11, %c0_12] : memref<1x64x8xf32, #tpu.memory_space<vmem>>, vector<1x64x8xf32>
    %17 = vector.shape_cast %16 : vector<1x64x8xf32> to vector<64x8xf32>
    %18 = vector.shape_cast %15 : vector<64x8xf32> to vector<1x64x8xf32>
    tpu.vector_store %arg4[%c0_10, %c0_11, %c0_12], %18 {strides = array<i32>} : memref<1x64x8xf32, #tpu.memory_space<vmem>>, vector<1x64x8xf32>,
    return
  }
  func.func @transform_0(%arg0: i32, %arg1: i32) -> (i32, i32, i32, i32) {
    %c0_i32 = arith.constant 0 : i32
    %c0_i32_0 = arith.constant 0 : i32
    %c0_i32_1 = arith.constant 0 : i32
    return %arg0, %c0_i32, %arg1, %c0_i32_0 : i32, i32, i32, i32
  }
  func.func @transform_1(%arg0: i32, %arg1: i32) -> (i32, i32) {
    %c0_i32 = arith.constant 0 : i32
    %c0_i32_0 = arith.constant 0 : i32
    %c0_i32_1 = arith.constant 0 : i32
    return %c0_i32, %c0_i32_0 : i32, i32
  }
  func.func @transform_2(%arg0: i32, %arg1: i32) -> (i32, i32, i32) {
    %c0_i32 = arith.constant 0 : i32
    %c0_i32_0 = arith.constant 0 : i32
    return %arg0, %arg1, %c0_i32 : i32, i32, i32
  }
}

</mosaic_0001>

<llo_original>
// kernel: encoder_conv_forward.1
$region0: #{encoder_conv_forward.1}
  #allocation0 [shape = 'u32[]', space=smem, size = 0x4, offset = 0x4, fixed_abs, tag = 'smem constant byte address 0x4 - core index']
  #allocation1 [shape = 'u32[72,128]{1,0:T(1,128)}', space=vmem, size = 0x9000, scoped, tag = 'internal scratch']
  %s0 = inlined_call_operand.vmem [shape: bf16[2,4,64,256], index: 0, kind: input, shape index: {}]
  %s1 = inlined_call_operand.vmem [shape: bf16[256,8], index: 1, kind: input, shape index: {}]
  %s2 = inlined_call_operand.vmem [shape: f32[2,64,8], index: 2, kind: output, shape index: {}]
  %s3 = sld [smem:[#allocation0]]
  $region41: #{encoder_conv_forward.1} parent=0
    _
  %s5 = ssub.s32 1, %s3
  %s6 = scalar_select 0, %s5, %s3
  loop: start=0, step=1, limit=4
  $region2: #{encoder_conv_forward.1} parent=0 // loop_pre_header
    _
  $region3: #{encoder_conv_forward.1} parent=0 // loop_header
    %s8 = sphi 0, %s12
    %p9 = scmp.ge.s32.totalorder %s8, 4
    %s15 = sphi 0, %s27
    %s16 = sphi 0, %s23
    %s17 = sphi 0, %s15
    %s18 = sphi 0, %s16
    %s19 = sphi 0, %s17
    %s20 = sphi 0, %s18
    %s32 = sphi 0, %s34
    %s35 = sphi 0, %s32
    %s36 = sphi 0, %s35
    %s52 = sphi 0, %s36
    %s56 = sphi 0, %s56
    %s58 = sphi 0, %s56
    %s59 = sphi 0, %s58
    %s73 = sphi 0, %s59
    %s81 = sphi 0, %s83
    %s84 = sphi 0, %s81
    %s85 = sphi 0, %s84
    %s101 = sphi 0, %s85
  $region4: #{encoder_conv_forward.1} parent=0 // loop_header_branch
    %11 = sbr.rel (%p9) target = $region8
  $region5: #{encoder_conv_forward.1} parent=0 // loop_body
    %s13 = ssub.s32 %s8, 1
    %s14 = ssub.s32 %s8, 2
    %s21 = sadd.s32 1, %s16
    %p22 = scmp.ge.s32.totalorder %s21, 1
    %s23 = scalar_select %p22, 0, %s21
    %s24 = sadd.s32 1, %s15
    %s25 = scalar_select %p22, %s24, %s15
    %p26 = scmp.ge.s32.totalorder %s25, 2
    %s27 = scalar_select %p26, 0, %s25
    %s28 = ssub.s32 %s15, %s27
    %s29 = ssub.s32 %s16, %s23
    %s30 = sor.u32 %s28, %s29
    %p31 = scmp.eq.s32.totalorder %s30, 0
    %s33 = sadd.s32 %s32, 1
    %s34 = scalar_select %p31, %s32, %s33
    %p37 = pneg %p31
    %p38 = scmp.eq.s32.totalorder %s8, 1
    %p39 = por %p37, %p38
    %p40 = scmp.ne.s32.totalorder %s32, %s35
    %p41 = scmp.eq.s32.totalorder %s8, 0
    %p42 = por %p40, %p41
    %p43 = scmp.ne.s32.totalorder %s32, %s35
    %p44 = scmp.eq.s32.totalorder %s13, 1
    %p45 = por %p43, %p44
    %p46 = scmp.ne.s32.totalorder %s35, %s36
    %p47 = scmp.eq.s32.totalorder %s13, 0
    %p48 = por %p46, %p47
    %p49 = scmp.ne.s32.totalorder %s35, %s36
    %p50 = scmp.eq.s32.totalorder %s14, 1
    %p51 = por %p49, %p50
    %p53 = scmp.ne.s32.totalorder %s36, %s52
    %p54 = scmp.eq.s32.totalorder %s14, 0
    %p55 = por %p53, %p54
    %s57 = sadd.s32 %s56, 1
    %p60 = scmp.eq.s32.totalorder %s8, 1
    %p61 = scmp.ne.s32.totalorder %s56, %s58
    %p62 = scmp.eq.s32.totalorder %s8, 0
    %p63 = por %p61, %p62
    %p64 = scmp.ne.s32.totalorder %s56, %s58
    %p65 = scmp.eq.s32.totalorder %s13, 1
    %p66 = por %p64, %p65
    %p67 = scmp.ne.s32.totalorder %s58, %s59
    %p68 = scmp.eq.s32.totalorder %s13, 0
    %p69 = por %p67, %p68
    %p70 = scmp.ne.s32.totalorder %s58, %s59
    %p71 = scmp.eq.s32.totalorder %s14, 1
    %p72 = por %p70, %p71
    %p74 = scmp.ne.s32.totalorder %s59, %s73
    %p75 = scmp.eq.s32.totalorder %s14, 0
    %p76 = por %p74, %p75
    %s77 = ssub.s32 %s15, %s27
    %s78 = ssub.s32 %s16, %s23
    %s79 = sor.u32 %s77, %s78
    %p80 = scmp.eq.s32.totalorder %s79, 0
    %s82 = sadd.s32 %s81, 1
    %s83 = scalar_select %p80, %s81, %s82
    %p86 = pneg %p80
    %p87 = scmp.eq.s32.totalorder %s8, 1
    %p88 = por %p86, %p87
    %p89 = scmp.ne.s32.totalorder %s81, %s84
    %p90 = scmp.eq.s32.totalorder %s8, 0
    %p91 = por %p89, %p90
    %p92 = scmp.ne.s32.totalorder %s81, %s84
    %p93 = scmp.eq.s32.totalorder %s13, 1
    %p94 = por %p92, %p93
    %p95 = scmp.ne.s32.totalorder %s84, %s85
    %p96 = scmp.eq.s32.totalorder %s13, 0
    %p97 = por %p95, %p96
    %p98 = scmp.ne.s32.totalorder %s84, %s85
    %p99 = scmp.eq.s32.totalorder %s14, 1
    %p100 = por %p98, %p99
    %p102 = scmp.ne.s32.totalorder %s85, %s101
    %p103 = scmp.eq.s32.totalorder %s14, 0
    %p104 = por %p102, %p103
    %p105 = scmp.le.s32.totalorder 1, %s8
    %p106 = scmp.lt.s32.totalorder %s8, 3
    %p107 = pnand %p105, %p106
    %p108 = pneg %p107
    // Predicated region
    $region9: #{encoder_conv_forward.1} parent=5 // pred_check
      _
    $region10: #{encoder_conv_forward.1} parent=5 // pred_check_branch
      %110 = sbr.rel (%p107) target = $region12
    $region11: #{encoder_conv_forward.1} parent=5 // pred_region
      %s111 = ssub.s32 %s8, 1
      // Predicated region
      $region13: #{encoder_conv_forward.1} parent=11 // pred_check
        %p112 = pneg %p69
      $region14: #{encoder_conv_forward.1} parent=11 // pred_check_branch
        %114 = sbr.rel (%p112) target = $region16
      $region15: #{encoder_conv_forward.1} parent=11 // pred_region
        _
      $region16: #{encoder_conv_forward.1} parent=11 // pred_fallthru
        _
    $region12: #{encoder_conv_forward.1} parent=5 // pred_fallthru
      _
    %p115 = scmp.lt.s32.totalorder %s8, 2
    // Predicated region
    $region17: #{encoder_conv_forward.1} parent=5 // pred_check
      %p116 = pneg %p115
    $region18: #{encoder_conv_forward.1} parent=5 // pred_check_branch
      %118 = sbr.rel (%p116) target = $region20
    $region19: #{encoder_conv_forward.1} parent=5 // pred_region
      // Predicated region
      $region21: #{encoder_conv_forward.1} parent=19 // pred_check
        %p119 = pneg %p42
      $region22: #{encoder_conv_forward.1} parent=19 // pred_check_branch
        %121 = sbr.rel (%p119) target = $region24
      $region23: #{encoder_conv_forward.1} parent=19 // pred_region
        %s122 = smul.u32 8, %s16
        %p123 = scmp.lt.s32.totalorder %s15, 1
        %s124 = scalar_select %p123, %s15, 1
        %p125 = scmp.lt.s32.totalorder %s122, 7
        %s126 = scalar_select %p125, %s122, 7
        %s127 = smul.addr %s126, 2
        %s128 = smul.addr %s124, 64
        %s129 = sadd.s32 %s127, %s128
        %s130 = smul.addr %s129, 4
        %s131 = scalar_lea.vmem %s0, %s130
        %s132 = smul.u32 8, %s16
      $region24: #{encoder_conv_forward.1} parent=19 // pred_fallthru
        _
    $region20: #{encoder_conv_forward.1} parent=5 // pred_fallthru
      _
    %p133 = scmp.le.s32.totalorder 1, %s8
    %p134 = scmp.lt.s32.totalorder %s8, 3
    %p135 = pnand %p133, %p134
    %p136 = pneg %p135
    // Predicated region
    $region25: #{encoder_conv_forward.1} parent=5 // pred_check
      _
    $region26: #{encoder_conv_forward.1} parent=5 // pred_check_branch
      %138 = sbr.rel (%p135) target = $region28
    $region27: #{encoder_conv_forward.1} parent=5 // pred_region
      %s139 = ssub.s32 %s8, 1
      %s140 = smul.u32 8, %s18
      %p141 = scmp.lt.s32.totalorder %s17, 1
      %s142 = scalar_select %p141, %s17, 1
      %p143 = scmp.lt.s32.totalorder %s140, 7
      %s144 = scalar_select %p143, %s140, 7
      %s145 = smul.addr %s144, 2
      %s146 = smul.addr %s142, 64
      %s147 = sadd.s32 %s145, %s146
      %s148 = smul.addr %s147, 4
      %s149 = scalar_lea.vmem %s0, %s148
      %p150 = pneg %p48
      %p151 = pneg %p45
      %p152 = pneg %p69
      %p153 = pneg %p66
      %p154 = pneg %p97
      %p155 = pneg %p94
      %s156 = smul.u32 8, %s18
      %p157 = scmp.lt.s32.totalorder %s17, 1
      %s158 = scalar_select %p157, %s17, 1
      %p159 = scmp.lt.s32.totalorder %s156, 7
      %s160 = scalar_select %p159, %s156, 7
      %s161 = smul.addr %s158, 8
      %s162 = sadd.s32 %s160, %s161
      %s163 = smul.addr %s162, 8
      %s164 = scalar_lea.vmem %s2, %s163
      %s165 = smul.u32 8, %s18
      %p166 = scmp.lt.s32.totalorder %s17, 1
      %s167 = scalar_select %p166, %s17, 1
      %p168 = scmp.lt.s32.totalorder %s165, 7
      %s169 = scalar_select %p168, %s165, 7
      %s170 = smul.addr %s169, 2
      %s171 = smul.addr %s167, 64
      %s172 = sadd.s32 %s170, %s171
      %s173 = smul.addr %s172, 4
      %s174 = scalar_lea.vmem %s0, %s173
      %s175 = smul.u32 8, %s18
      %s176 = smul.u32 8, %s18
      %p177 = scmp.lt.s32.totalorder %s17, 1
      %s178 = scalar_select %p177, %s17, 1
      %p179 = scmp.lt.s32.totalorder %s176, 7
      %s180 = scalar_select %p179, %s176, 7
      %s181 = smul.addr %s178, 8
      %s182 = sadd.s32 %s180, %s181
      %s183 = smul.addr %s182, 8
      %s184 = scalar_lea.vmem %s2, %s183
      %s185 = smul.u32 8, %s18
      %v186 = vld [vmem:[%s1] sm:$0xf]
      %v187 = vld [vmem:[%s1 + $0x4] sm:$0xf]
      %v188 = vld [vmem:[%s1 + $0x8] sm:$0xf]
      %v189 = vld [vmem:[%s1 + $0xc] sm:$0xf]
      %v190 = vld [vmem:[%s1 + $0x10] sm:$0xf]
      %v191 = vld [vmem:[%s1 + $0x14] sm:$0xf]
      %v192 = vld [vmem:[%s1 + $0x18] sm:$0xf]
      %v193 = vld [vmem:[%s1 + $0x1c] sm:$0xf]
      %v194 = vld [vmem:[%s1 + $0x20] sm:$0xf]
      %v195 = vld [vmem:[%s1 + $0x24] sm:$0xf]
      %v196 = vld [vmem:[%s1 + $0x28] sm:$0xf]
      %v197 = vld [vmem:[%s1 + $0x2c] sm:$0xf]
      %v198 = vld [vmem:[%s1 + $0x30] sm:$0xf]
      %v199 = vld [vmem:[%s1 + $0x34] sm:$0xf]
      %v200 = vld [vmem:[%s1 + $0x38] sm:$0xf]
      %v201 = vld [vmem:[%s1 + $0x3c] sm:$0xf]
      %v202 = vld [vmem:[%s1 + $0x40] sm:$0xf]
      %v203 = vld [vmem:[%s1 + $0x44] sm:$0xf]
      %v204 = vld [vmem:[%s1 + $0x48] sm:$0xf]
      %v205 = vld [vmem:[%s1 + $0x4c] sm:$0xf]
      %v206 = vld [vmem:[%s1 + $0x50] sm:$0xf]
      %v207 = vld [vmem:[%s1 + $0x54] sm:$0xf]
      %v208 = vld [vmem:[%s1 + $0x58] sm:$0xf]
      %v209 = vld [vmem:[%s1 + $0x5c] sm:$0xf]
      %v210 = vld [vmem:[%s1 + $0x60] sm:$0xf]
      %v211 = vld [vmem:[%s1 + $0x64] sm:$0xf]
      %v212 = vld [vmem:[%s1 + $0x68] sm:$0xf]
      %v213 = vld [vmem:[%s1 + $0x6c] sm:$0xf]
      %v214 = vld [vmem:[%s1 + $0x70] sm:$0xf]
      %v215 = vld [vmem:[%s1 + $0x74] sm:$0xf]
      %v216 = vld [vmem:[%s1 + $0x78] sm:$0xf]
      %v217 = vld [vmem:[%s1 + $0x7c] sm:$0xf]
      %v218 = vld [vmem:[%s174] sm:$0xff]
      %v219 = vld [vmem:[%s174 + $0x8] sm:$0xff]
      %v220 = vld [vmem:[%s174 + $0x10] sm:$0xff]
      %v221 = vld [vmem:[%s174 + $0x18] sm:$0xff]
      %v222 = vld [vmem:[%s174 + $0x20] sm:$0xff]
      %v223 = vld [vmem:[%s174 + $0x28] sm:$0xff]
      %v224 = vld [vmem:[%s174 + $0x30] sm:$0xff]
      %v225 = vld [vmem:[%s174 + $0x38] sm:$0xff]
      %v226 = vld [vmem:[%s174 + $0x40] sm:$0xff]
      %v227 = vld [vmem:[%s174 + $0x48] sm:$0xff]
      %v228 = vld [vmem:[%s174 + $0x50] sm:$0xff]
      %v229 = vld [vmem:[%s174 + $0x58] sm:$0xff]
      %v230 = vld [vmem:[%s174 + $0x60] sm:$0xff]
      %v231 = vld [vmem:[%s174 + $0x68] sm:$0xff]
      %v232 = vld [vmem:[%s174 + $0x70] sm:$0xff]
      %v233 = vld [vmem:[%s174 + $0x78] sm:$0xff]
      %v234 = vld [vmem:[%s174 + $0x80] sm:$0xff]
      %v235 = vld [vmem:[%s174 + $0x88] sm:$0xff]
      %v236 = vld [vmem:[%s174 + $0x90] sm:$0xff]
      %v237 = vld [vmem:[%s174 + $0x98] sm:$0xff]
      %v238 = vld [vmem:[%s174 + $0xa0] sm:$0xff]
      %v239 = vld [vmem:[%s174 + $0xa8] sm:$0xff]
      %v240 = vld [vmem:[%s174 + $0xb0] sm:$0xff]
      %v241 = vld [vmem:[%s174 + $0xb8] sm:$0xff]
      %v242 = vld [vmem:[%s174 + $0xc0] sm:$0xff]
      %v243 = vld [vmem:[%s174 + $0xc8] sm:$0xff]
      %v244 = vld [vmem:[%s174 + $0xd0] sm:$0xff]
      %v245 = vld [vmem:[%s174 + $0xd8] sm:$0xff]
      %v246 = vld [vmem:[%s174 + $0xe0] sm:$0xff]
      %v247 = vld [vmem:[%s174 + $0xe8] sm:$0xff]
      %v248 = vld [vmem:[%s174 + $0xf0] sm:$0xff]
      %v249 = vld [vmem:[%s174 + $0xf8] sm:$0xff]
      %v282 = vunpack.c.l.b16 %v218
      %v283 = vunpack.c.h.b16 %v218
      %v284 = vunpack.c.l.b16 %v219
      %v285 = vunpack.c.h.b16 %v219
      %v286 = vunpack.c.l.b16 %v220
      %v287 = vunpack.c.h.b16 %v220
      %v288 = vunpack.c.l.b16 %v221
      %v289 = vunpack.c.h.b16 %v221
      %v290 = vunpack.c.l.b16 %v222
      %v291 = vunpack.c.h.b16 %v222
      %v292 = vunpack.c.l.b16 %v223
      %v293 = vunpack.c.h.b16 %v223
      %v294 = vunpack.c.l.b16 %v224
      %v295 = vunpack.c.h.b16 %v224
      %v296 = vunpack.c.l.b16 %v225
      %v297 = vunpack.c.h.b16 %v225
      %v298 = vunpack.c.l.b16 %v226
      %v299 = vunpack.c.h.b16 %v226
      %v300 = vunpack.c.l.b16 %v227
      %v301 = vunpack.c.h.b16 %v227
      %v302 = vunpack.c.l.b16 %v228
      %v303 = vunpack.c.h.b16 %v228
      %v304 = vunpack.c.l.b16 %v229
      %v305 = vunpack.c.h.b16 %v229
      %v306 = vunpack.c.l.b16 %v230
      %v307 = vunpack.c.h.b16 %v230
      %v308 = vunpack.c.l.b16 %v231
      %v309 = vunpack.c.h.b16 %v231
      %v310 = vunpack.c.l.b16 %v232
      %v311 = vunpack.c.h.b16 %v232
      %v312 = vunpack.c.l.b16 %v233
      %v313 = vunpack.c.h.b16 %v233
      %v314 = vunpack.c.l.b16 %v234
      %v315 = vunpack.c.h.b16 %v234
      %v316 = vunpack.c.l.b16 %v235
      %v317 = vunpack.c.h.b16 %v235
      %v318 = vunpack.c.l.b16 %v236
      %v319 = vunpack.c.h.b16 %v236
      %v320 = vunpack.c.l.b16 %v237
      %v321 = vunpack.c.h.b16 %v237
      %v322 = vunpack.c.l.b16 %v238
      %v323 = vunpack.c.h.b16 %v238
      %v324 = vunpack.c.l.b16 %v239
      %v325 = vunpack.c.h.b16 %v239
      %v326 = vunpack.c.l.b16 %v240
      %v327 = vunpack.c.h.b16 %v240
      %v328 = vunpack.c.l.b16 %v241
      %v329 = vunpack.c.h.b16 %v241
      %v330 = vunpack.c.l.b16 %v242
      %v331 = vunpack.c.h.b16 %v242
      %v332 = vunpack.c.l.b16 %v243
      %v333 = vunpack.c.h.b16 %v243
      %v334 = vunpack.c.l.b16 %v244
      %v335 = vunpack.c.h.b16 %v244
      %v336 = vunpack.c.l.b16 %v245
      %v337 = vunpack.c.h.b16 %v245
      %v338 = vunpack.c.l.b16 %v246
      %v339 = vunpack.c.h.b16 %v246
      %v340 = vunpack.c.l.b16 %v247
      %v341 = vunpack.c.h.b16 %v247
      %v342 = vunpack.c.l.b16 %v248
      %v343 = vunpack.c.h.b16 %v248
      %v344 = vunpack.c.l.b16 %v249
      %v345 = vunpack.c.h.b16 %v249
      %v346 = vpack.c.b16 %v284, %v282
      %v347 = vpack.c.b16 %v285, %v283
      %v348 = vpack.c.b16 %v288, %v286
      %v349 = vpack.c.b16 %v289, %v287
      %v350 = vpack.c.b16 %v292, %v290
      %v351 = vpack.c.b16 %v293, %v291
      %v352 = vpack.c.b16 %v296, %v294
      %v353 = vpack.c.b16 %v297, %v295
      %v354 = vpack.c.b16 %v300, %v298
      %v355 = vpack.c.b16 %v301, %v299
      %v356 = vpack.c.b16 %v304, %v302
      %v357 = vpack.c.b16 %v305, %v303
      %v358 = vpack.c.b16 %v308, %v306
      %v359 = vpack.c.b16 %v309, %v307
      %v360 = vpack.c.b16 %v312, %v310
      %v361 = vpack.c.b16 %v313, %v311
      %v362 = vpack.c.b16 %v316, %v314
      %v363 = vpack.c.b16 %v317, %v315
      %v364 = vpack.c.b16 %v320, %v318
      %v365 = vpack.c.b16 %v321, %v319
      %v366 = vpack.c.b16 %v324, %v322
      %v367 = vpack.c.b16 %v325, %v323
      %v368 = vpack.c.b16 %v328, %v326
      %v369 = vpack.c.b16 %v329, %v327
      %v370 = vpack.c.b16 %v332, %v330
      %v371 = vpack.c.b16 %v333, %v331
      %v372 = vpack.c.b16 %v336, %v334
      %v373 = vpack.c.b16 %v337, %v335
      %v374 = vpack.c.b16 %v340, %v338
      %v375 = vpack.c.b16 %v341, %v339
      %v376 = vpack.c.b16 %v344, %v342
      %v377 = vpack.c.b16 %v345, %v343
      %v442 = vunpack.c.l.b16 %v186
      %v443 = vunpack.c.l.b16 %v187
      %v444 = vunpack.c.l.b16 %v188
      %v445 = vunpack.c.l.b16 %v189
      %v446 = vunpack.c.l.b16 %v190
      %v447 = vunpack.c.l.b16 %v191
      %v448 = vunpack.c.l.b16 %v192
      %v449 = vunpack.c.l.b16 %v193
      %v450 = vunpack.c.l.b16 %v194
      %v451 = vunpack.c.l.b16 %v195
      %v452 = vunpack.c.l.b16 %v196
      %v453 = vunpack.c.l.b16 %v197
      %v454 = vunpack.c.l.b16 %v198
      %v455 = vunpack.c.l.b16 %v199
      %v456 = vunpack.c.l.b16 %v200
      %v457 = vunpack.c.l.b16 %v201
      %v458 = vunpack.c.l.b16 %v202
      %v459 = vunpack.c.l.b16 %v203
      %v460 = vunpack.c.l.b16 %v204
      %v461 = vunpack.c.l.b16 %v205
      %v462 = vunpack.c.l.b16 %v206
      %v463 = vunpack.c.l.b16 %v207
      %v464 = vunpack.c.l.b16 %v208
      %v465 = vunpack.c.l.b16 %v209
      %v466 = vunpack.c.l.b16 %v210
      %v467 = vunpack.c.l.b16 %v211
      %v468 = vunpack.c.l.b16 %v212
      %v469 = vunpack.c.l.b16 %v213
      %v470 = vunpack.c.l.b16 %v214
      %v471 = vunpack.c.l.b16 %v215
      %v472 = vunpack.c.l.b16 %v216
      %v473 = vunpack.c.l.b16 %v217
      %v474 = vpack.c.b16 %v443, %v442
      %v475 = vpack.c.b16 %v445, %v444
      %v476 = vpack.c.b16 %v447, %v446
      %v477 = vpack.c.b16 %v449, %v448
      %v478 = vpack.c.b16 %v451, %v450
      %v479 = vpack.c.b16 %v453, %v452
      %v480 = vpack.c.b16 %v455, %v454
      %v481 = vpack.c.b16 %v457, %v456
      %v482 = vpack.c.b16 %v459, %v458
      %v483 = vpack.c.b16 %v461, %v460
      %v484 = vpack.c.b16 %v463, %v462
      %v485 = vpack.c.b16 %v465, %v464
      %v486 = vpack.c.b16 %v467, %v466
      %v487 = vpack.c.b16 %v469, %v468
      %v488 = vpack.c.b16 %v471, %v470
      %v489 = vpack.c.b16 %v473, %v472
      %506 = vmatpush.bf16.msra.mxu0 %v481
      %507 = vmatpush.bf16.msra.mxu0 %v480
      %508 = vmatpush.bf16.msra.mxu0 %v479
      %509 = vmatpush.bf16.msra.mxu0 %v478
      %510 = vmatpush.bf16.msra.mxu0 %v477
      %511 = vmatpush.bf16.msra.mxu0 %v476
      %512 = vmatpush.bf16.msra.mxu0 %v475
      %513 = vmatpush.bf16.msra.mxu0 %v474
      %514 = vmatmul.bf16.gmra.mxu0 %v346
      %v515 = vpop.f32.mrf.mxu0
      %v516 = vadd.f32 0.0, %v515
      %v517 = vpop.f32.mrf.mxu0
      %v518 = vadd.f32 0.0, %v517
      %519 = vmatmul.bf16.gmra.mxu0 %v348
      %v520 = vpop.f32.mrf.mxu0
      %v521 = vadd.f32 0.0, %v520
      %v522 = vpop.f32.mrf.mxu0
      %v523 = vadd.f32 0.0, %v522
      %524 = vmatmul.bf16.gmra.mxu0 %v350
      %v525 = vpop.f32.mrf.mxu0
      %v526 = vadd.f32 0.0, %v525
      %v527 = vpop.f32.mrf.mxu0
      %v528 = vadd.f32 0.0, %v527
      %529 = vmatmul.bf16.gmra.mxu0 %v352
      %v530 = vpop.f32.mrf.mxu0
      %v531 = vadd.f32 0.0, %v530
      %v532 = vpop.f32.mrf.mxu0
      %v533 = vadd.f32 0.0, %v532
      %534 = vmatmul.bf16.gmra.mxu0 %v354
      %v535 = vpop.f32.mrf.mxu0
      %v536 = vadd.f32 0.0, %v535
      %v537 = vpop.f32.mrf.mxu0
      %v538 = vadd.f32 0.0, %v537
      %539 = vmatmul.bf16.gmra.mxu0 %v356
      %v540 = vpop.f32.mrf.mxu0
      %v541 = vadd.f32 0.0, %v540
      %v542 = vpop.f32.mrf.mxu0
      %v543 = vadd.f32 0.0, %v542
      %544 = vmatmul.bf16.gmra.mxu0 %v358
      %v545 = vpop.f32.mrf.mxu0
      %v546 = vadd.f32 0.0, %v545
      %v547 = vpop.f32.mrf.mxu0
      %v548 = vadd.f32 0.0, %v547
      %549 = vmatmul.bf16.gmra.mxu0 %v360
      %v550 = vpop.f32.mrf.mxu0
      %v551 = vadd.f32 0.0, %v550
      %v552 = vpop.f32.mrf.mxu0
      %v553 = vadd.f32 0.0, %v552
      %554 = vmatmul.bf16.gmra.mxu0 %v362
      %v555 = vpop.f32.mrf.mxu0
      %v556 = vadd.f32 0.0, %v555
      %v557 = vpop.f32.mrf.mxu0
      %v558 = vadd.f32 0.0, %v557
      %559 = vmatmul.bf16.gmra.mxu0 %v364
      %v560 = vpop.f32.mrf.mxu0
      %v561 = vadd.f32 0.0, %v560
      %v562 = vpop.f32.mrf.mxu0
      %v563 = vadd.f32 0.0, %v562
      %564 = vmatmul.bf16.gmra.mxu0 %v366
      %v565 = vpop.f32.mrf.mxu0
      %v566 = vadd.f32 0.0, %v565
      %v567 = vpop.f32.mrf.mxu0
      %v568 = vadd.f32 0.0, %v567
      %569 = vmatmul.bf16.gmra.mxu0 %v368
      %v570 = vpop.f32.mrf.mxu0
      %v571 = vadd.f32 0.0, %v570
      %v572 = vpop.f32.mrf.mxu0
      %v573 = vadd.f32 0.0, %v572
      %574 = vmatmul.bf16.gmra.mxu0 %v370
      %v575 = vpop.f32.mrf.mxu0
      %v576 = vadd.f32 0.0, %v575
      %v577 = vpop.f32.mrf.mxu0
      %v578 = vadd.f32 0.0, %v577
      %579 = vmatmul.bf16.gmra.mxu0 %v372
      %v580 = vpop.f32.mrf.mxu0
      %v581 = vadd.f32 0.0, %v580
      %v582 = vpop.f32.mrf.mxu0
      %v583 = vadd.f32 0.0, %v582
      %584 = vmatmul.bf16.gmra.mxu0 %v374
      %v585 = vpop.f32.mrf.mxu0
      %v586 = vadd.f32 0.0, %v585
      %v587 = vpop.f32.mrf.mxu0
      %v588 = vadd.f32 0.0, %v587
      %589 = vmatmul.bf16.gmra.mxu0 %v376
      %v590 = vpop.f32.mrf.mxu0
      %v591 = vadd.f32 0.0, %v590
      %v592 = vpop.f32.mrf.mxu0
      %v593 = vadd.f32 0.0, %v592
      %594 = vdwg.mxu0
      %595 = vmatpush.bf16.msra.mxu0 %v489
      %596 = vmatpush.bf16.msra.mxu0 %v488
      %597 = vmatpush.bf16.msra.mxu0 %v487
      %598 = vmatpush.bf16.msra.mxu0 %v486
      %599 = vmatpush.bf16.msra.mxu0 %v485
      %600 = vmatpush.bf16.msra.mxu0 %v484
      %601 = vmatpush.bf16.msra.mxu0 %v483
      %602 = vmatpush.bf16.msra.mxu0 %v482
      %603 = vmatmul.bf16.gmra.mxu0 %v347
      %v604 = vpop.f32.mrf.mxu0
      %v605 = vadd.f32 %v516, %v604
      %v606 = vpop.f32.mrf.mxu0
      %v607 = vadd.f32 %v518, %v606
      %608 = vmatmul.bf16.gmra.mxu0 %v349
      %v609 = vpop.f32.mrf.mxu0
      %v610 = vadd.f32 %v521, %v609
      %v611 = vpop.f32.mrf.mxu0
      %v612 = vadd.f32 %v523, %v611
      %613 = vmatmul.bf16.gmra.mxu0 %v351
      %v614 = vpop.f32.mrf.mxu0
      %v615 = vadd.f32 %v526, %v614
      %v616 = vpop.f32.mrf.mxu0
      %v617 = vadd.f32 %v528, %v616
      %618 = vmatmul.bf16.gmra.mxu0 %v353
      %v619 = vpop.f32.mrf.mxu0
      %v620 = vadd.f32 %v531, %v619
      %v621 = vpop.f32.mrf.mxu0
      %v622 = vadd.f32 %v533, %v621
      %623 = vmatmul.bf16.gmra.mxu0 %v355
      %v624 = vpop.f32.mrf.mxu0
      %v625 = vadd.f32 %v536, %v624
      %v626 = vpop.f32.mrf.mxu0
      %v627 = vadd.f32 %v538, %v626
      %628 = vmatmul.bf16.gmra.mxu0 %v357
      %v629 = vpop.f32.mrf.mxu0
      %v630 = vadd.f32 %v541, %v629
      %v631 = vpop.f32.mrf.mxu0
      %v632 = vadd.f32 %v543, %v631
      %633 = vmatmul.bf16.gmra.mxu0 %v359
      %v634 = vpop.f32.mrf.mxu0
      %v635 = vadd.f32 %v546, %v634
      %v636 = vpop.f32.mrf.mxu0
      %v637 = vadd.f32 %v548, %v636
      %638 = vmatmul.bf16.gmra.mxu0 %v361
      %v639 = vpop.f32.mrf.mxu0
      %v640 = vadd.f32 %v551, %v639
      %v641 = vpop.f32.mrf.mxu0
      %v642 = vadd.f32 %v553, %v641
      %643 = vmatmul.bf16.gmra.mxu0 %v363
      %v644 = vpop.f32.mrf.mxu0
      %v645 = vadd.f32 %v556, %v644
      %v646 = vpop.f32.mrf.mxu0
      %v647 = vadd.f32 %v558, %v646
      %648 = vmatmul.bf16.gmra.mxu0 %v365
      %v649 = vpop.f32.mrf.mxu0
      %v650 = vadd.f32 %v561, %v649
      %v651 = vpop.f32.mrf.mxu0
      %v652 = vadd.f32 %v563, %v651
      %653 = vmatmul.bf16.gmra.mxu0 %v367
      %v654 = vpop.f32.mrf.mxu0
      %v655 = vadd.f32 %v566, %v654
      %v656 = vpop.f32.mrf.mxu0
      %v657 = vadd.f32 %v568, %v656
      %658 = vmatmul.bf16.gmra.mxu0 %v369
      %v659 = vpop.f32.mrf.mxu0
      %v660 = vadd.f32 %v571, %v659
      %v661 = vpop.f32.mrf.mxu0
      %v662 = vadd.f32 %v573, %v661
      %663 = vmatmul.bf16.gmra.mxu0 %v371
      %v664 = vpop.f32.mrf.mxu0
      %v665 = vadd.f32 %v576, %v664
      %v666 = vpop.f32.mrf.mxu0
      %v667 = vadd.f32 %v578, %v666
      %668 = vmatmul.bf16.gmra.mxu0 %v373
      %v669 = vpop.f32.mrf.mxu0
      %v670 = vadd.f32 %v581, %v669
      %v671 = vpop.f32.mrf.mxu0
      %v672 = vadd.f32 %v583, %v671
      %673 = vmatmul.bf16.gmra.mxu0 %v375
      %v674 = vpop.f32.mrf.mxu0
      %v675 = vadd.f32 %v586, %v674
      %v676 = vpop.f32.mrf.mxu0
      %v677 = vadd.f32 %v588, %v676
      %678 = vmatmul.bf16.gmra.mxu0 %v377
      %v679 = vpop.f32.mrf.mxu0
      %v680 = vadd.f32 %v591, %v679
      %v681 = vpop.f32.mrf.mxu0
      %v682 = vadd.f32 %v593, %v681
      %683 = vdwg.mxu0
      %vm684 = vcmp.ge.f32.partialorder %v605, 0.0
      %vm685 = vcmp.ge.f32.partialorder %v607, 0.0
      %vm686 = vcmp.ge.f32.partialorder %v610, 0.0
      %vm687 = vcmp.ge.f32.partialorder %v612, 0.0
      %vm688 = vcmp.ge.f32.partialorder %v615, 0.0
      %vm689 = vcmp.ge.f32.partialorder %v617, 0.0
      %vm690 = vcmp.ge.f32.partialorder %v620, 0.0
      %vm691 = vcmp.ge.f32.partialorder %v622, 0.0
      %vm692 = vcmp.ge.f32.partialorder %v625, 0.0
      %vm693 = vcmp.ge.f32.partialorder %v627, 0.0
      %vm694 = vcmp.ge.f32.partialorder %v630, 0.0
      %vm695 = vcmp.ge.f32.partialorder %v632, 0.0
      %vm696 = vcmp.ge.f32.partialorder %v635, 0.0
      %vm697 = vcmp.ge.f32.partialorder %v637, 0.0
      %vm698 = vcmp.ge.f32.partialorder %v640, 0.0
      %vm699 = vcmp.ge.f32.partialorder %v642, 0.0
      %vm700 = vcmp.ge.f32.partialorder %v645, 0.0
      %vm701 = vcmp.ge.f32.partialorder %v647, 0.0
      %vm702 = vcmp.ge.f32.partialorder %v650, 0.0
      %vm703 = vcmp.ge.f32.partialorder %v652, 0.0
      %vm704 = vcmp.ge.f32.partialorder %v655, 0.0
      %vm705 = vcmp.ge.f32.partialorder %v657, 0.0
      %vm706 = vcmp.ge.f32.partialorder %v660, 0.0
      %vm707 = vcmp.ge.f32.partialorder %v662, 0.0
      %vm708 = vcmp.ge.f32.partialorder %v665, 0.0
      %vm709 = vcmp.ge.f32.partialorder %v667, 0.0
      %vm710 = vcmp.ge.f32.partialorder %v670, 0.0
      %vm711 = vcmp.ge.f32.partialorder %v672, 0.0
      %vm712 = vcmp.ge.f32.partialorder %v675, 0.0
      %vm713 = vcmp.ge.f32.partialorder %v677, 0.0
      %vm714 = vcmp.ge.f32.partialorder %v680, 0.0
      %vm715 = vcmp.ge.f32.partialorder %v682, 0.0
      %v716 = vmul.f32 %v605, 0.01
      %v717 = vmul.f32 %v607, 0.01
      %v718 = vmul.f32 %v610, 0.01
      %v719 = vmul.f32 %v612, 0.01
      %v720 = vmul.f32 %v615, 0.01
      %v721 = vmul.f32 %v617, 0.01
      %v722 = vmul.f32 %v620, 0.01
      %v723 = vmul.f32 %v622, 0.01
      %v724 = vmul.f32 %v625, 0.01
      %v725 = vmul.f32 %v627, 0.01
      %v726 = vmul.f32 %v630, 0.01
      %v727 = vmul.f32 %v632, 0.01
      %v728 = vmul.f32 %v635, 0.01
      %v729 = vmul.f32 %v637, 0.01
      %v730 = vmul.f32 %v640, 0.01
      %v731 = vmul.f32 %v642, 0.01
      %v732 = vmul.f32 %v645, 0.01
      %v733 = vmul.f32 %v647, 0.01
      %v734 = vmul.f32 %v650, 0.01
      %v735 = vmul.f32 %v652, 0.01
      %v736 = vmul.f32 %v655, 0.01
      %v737 = vmul.f32 %v657, 0.01
      %v738 = vmul.f32 %v660, 0.01
      %v739 = vmul.f32 %v662, 0.01
      %v740 = vmul.f32 %v665, 0.01
      %v741 = vmul.f32 %v667, 0.01
      %v742 = vmul.f32 %v670, 0.01
      %v743 = vmul.f32 %v672, 0.01
      %v744 = vmul.f32 %v675, 0.01
      %v745 = vmul.f32 %v677, 0.01
      %v746 = vmul.f32 %v680, 0.01
      %v747 = vmul.f32 %v682, 0.01
      %v748 = vsel %vm684, %v605, %v716
      %v749 = vsel %vm685, %v607, %v717
      %v750 = vsel %vm686, %v610, %v718
      %v751 = vsel %vm687, %v612, %v719
      %v752 = vsel %vm688, %v615, %v720
      %v753 = vsel %vm689, %v617, %v721
      %v754 = vsel %vm690, %v620, %v722
      %v755 = vsel %vm691, %v622, %v723
      %v756 = vsel %vm692, %v625, %v724
      %v757 = vsel %vm693, %v627, %v725
      %v758 = vsel %vm694, %v630, %v726
      %v759 = vsel %vm695, %v632, %v727
      %v760 = vsel %vm696, %v635, %v728
      %v761 = vsel %vm697, %v637, %v729
      %v762 = vsel %vm698, %v640, %v730
      %v763 = vsel %vm699, %v642, %v731
      %v764 = vsel %vm700, %v645, %v732
      %v765 = vsel %vm701, %v647, %v733
      %v766 = vsel %vm702, %v650, %v734
      %v767 = vsel %vm703, %v652, %v735
      %v768 = vsel %vm704, %v655, %v736
      %v769 = vsel %vm705, %v657, %v737
      %v770 = vsel %vm706, %v660, %v738
      %v771 = vsel %vm707, %v662, %v739
      %v772 = vsel %vm708, %v665, %v740
      %v773 = vsel %vm709, %v667, %v741
      %v774 = vsel %vm710, %v670, %v742
      %v775 = vsel %vm711, %v672, %v743
      %v776 = vsel %vm712, %v675, %v744
      %v777 = vsel %vm713, %v677, %v745
      %v778 = vsel %vm714, %v680, %v746
      %v779 = vsel %vm715, %v682, %v747
      %vm780 = vcmask 64512
      %v781 = vsel %vm780, %v748, -inf
      %v782 = vsel %vm780, %v756, -inf
      %v783 = vmax.f32 %v781, %v782
      %v784 = vsel %vm780, %v764, -inf
      %v785 = vmax.f32 %v783, %v784
      %v786 = vsel %vm780, %v772, -inf
      %v787 = vmax.f32 %v785, %v786
      %v788 = vsel %vm780, %v749, -inf
      %v789 = vsel %vm780, %v757, -inf
      %v790 = vmax.f32 %v788, %v789
      %v791 = vsel %vm780, %v765, -inf
      %v792 = vmax.f32 %v790, %v791
      %v793 = vsel %vm780, %v773, -inf
      %v794 = vmax.f32 %v792, %v793
      %v795 = vsel %vm780, %v750, -inf
      %v796 = vsel %vm780, %v758, -inf
      %v797 = vmax.f32 %v795, %v796
      %v798 = vsel %vm780, %v766, -inf
      %v799 = vmax.f32 %v797, %v798
      %v800 = vsel %vm780, %v774, -inf
      %v801 = vmax.f32 %v799, %v800
      %v802 = vsel %vm780, %v751, -inf
      %v803 = vsel %vm780, %v759, -inf
      %v804 = vmax.f32 %v802, %v803
      %v805 = vsel %vm780, %v767, -inf
      %v806 = vmax.f32 %v804, %v805
      %v807 = vsel %vm780, %v775, -inf
      %v808 = vmax.f32 %v806, %v807
      %v809 = vsel %vm780, %v752, -inf
      %v810 = vsel %vm780, %v760, -inf
      %v811 = vmax.f32 %v809, %v810
      %v812 = vsel %vm780, %v768, -inf
      %v813 = vmax.f32 %v811, %v812
      %v814 = vsel %vm780, %v776, -inf
      %v815 = vmax.f32 %v813, %v814
      %v816 = vsel %vm780, %v753, -inf
      %v817 = vsel %vm780, %v761, -inf
      %v818 = vmax.f32 %v816, %v817
      %v819 = vsel %vm780, %v769, -inf
      %v820 = vmax.f32 %v818, %v819
      %v821 = vsel %vm780, %v777, -inf
      %v822 = vmax.f32 %v820, %v821
      %v823 = vsel %vm780, %v754, -inf
      %v824 = vsel %vm780, %v762, -inf
      %v825 = vmax.f32 %v823, %v824
      %v826 = vsel %vm780, %v770, -inf
      %v827 = vmax.f32 %v825, %v826
      %v828 = vsel %vm780, %v778, -inf
      %v829 = vmax.f32 %v827, %v828
      %v830 = vsel %vm780, %v755, -inf
      %v831 = vsel %vm780, %v763, -inf
      %v832 = vmax.f32 %v830, %v831
      %v833 = vsel %vm780, %v771, -inf
      %v834 = vmax.f32 %v832, %v833
      %v835 = vsel %vm780, %v779, -inf
      %v836 = vmax.f32 %v834, %v835
      %v837 = vsel %vm780, %v748, 0.0
      %v838 = vsel %vm780, %v756, 0.0
      %v839 = vadd.f32 %v837, %v838
      %v840 = vsel %vm780, %v764, 0.0
      %v841 = vadd.f32 %v839, %v840
      %v842 = vsel %vm780, %v772, 0.0
      %v843 = vadd.f32 %v841, %v842
      %v844 = vsel %vm780, %v749, 0.0
      %v845 = vsel %vm780, %v757, 0.0
      %v846 = vadd.f32 %v844, %v845
      %v847 = vsel %vm780, %v765, 0.0
      %v848 = vadd.f32 %v846, %v847
      %v849 = vsel %vm780, %v773, 0.0
      %v850 = vadd.f32 %v848, %v849
      %v851 = vsel %vm780, %v750, 0.0
      %v852 = vsel %vm780, %v758, 0.0
      %v853 = vadd.f32 %v851, %v852
      %v854 = vsel %vm780, %v766, 0.0
      %v855 = vadd.f32 %v853, %v854
      %v856 = vsel %vm780, %v774, 0.0
      %v857 = vadd.f32 %v855, %v856
      %v858 = vsel %vm780, %v751, 0.0
      %v859 = vsel %vm780, %v759, 0.0
      %v860 = vadd.f32 %v858, %v859
      %v861 = vsel %vm780, %v767, 0.0
      %v862 = vadd.f32 %v860, %v861
      %v863 = vsel %vm780, %v775, 0.0
      %v864 = vadd.f32 %v862, %v863
      %v865 = vsel %vm780, %v752, 0.0
      %v866 = vsel %vm780, %v760, 0.0
      %v867 = vadd.f32 %v865, %v866
      %v868 = vsel %vm780, %v768, 0.0
      %v869 = vadd.f32 %v867, %v868
      %v870 = vsel %vm780, %v776, 0.0
      %v871 = vadd.f32 %v869, %v870
      %v872 = vsel %vm780, %v753, 0.0
      %v873 = vsel %vm780, %v761, 0.0
      %v874 = vadd.f32 %v872, %v873
      %v875 = vsel %vm780, %v769, 0.0
      %v876 = vadd.f32 %v874, %v875
      %v877 = vsel %vm780, %v777, 0.0
      %v878 = vadd.f32 %v876, %v877
      %v879 = vsel %vm780, %v754, 0.0
      %v880 = vsel %vm780, %v762, 0.0
      %v881 = vadd.f32 %v879, %v880
      %v882 = vsel %vm780, %v770, 0.0
      %v883 = vadd.f32 %v881, %v882
      %v884 = vsel %vm780, %v778, 0.0
      %v885 = vadd.f32 %v883, %v884
      %v886 = vsel %vm780, %v755, 0.0
      %v887 = vsel %vm780, %v763, 0.0
      %v888 = vadd.f32 %v886, %v887
      %v889 = vsel %vm780, %v771, 0.0
      %v890 = vadd.f32 %v888, %v889
      %v891 = vsel %vm780, %v779, 0.0
      %v892 = vadd.f32 %v890, %v891
      %v893 = vmul.f32 %v843, 0.25
      %v894 = vmul.f32 %v850, 0.25
      %v895 = vmul.f32 %v857, 0.25
      %v896 = vmul.f32 %v864, 0.25
      %v897 = vmul.f32 %v871, 0.25
      %v898 = vmul.f32 %v878, 0.25
      %v899 = vmul.f32 %v885, 0.25
      %v900 = vmul.f32 %v892, 0.25
      %v901 = vadd.f32 %v787, %v893
      %v902 = vadd.f32 %v794, %v894
      %v903 = vadd.f32 %v801, %v895
      %v904 = vadd.f32 %v808, %v896
      %v905 = vadd.f32 %v815, %v897
      %v906 = vadd.f32 %v822, %v898
      %v907 = vadd.f32 %v829, %v899
      %v908 = vadd.f32 %v836, %v900
      %909 = vst.msk [vmem:[%s184] sm:$0xff] %vm780, %v901
      %910 = vst.msk [vmem:[%s184 + $0x8] sm:$0xff] %vm780, %v902
      %911 = vst.msk [vmem:[%s184 + $0x10] sm:$0xff] %vm780, %v903
      %912 = vst.msk [vmem:[%s184 + $0x18] sm:$0xff] %vm780, %v904
      %913 = vst.msk [vmem:[%s184 + $0x20] sm:$0xff] %vm780, %v905
      %914 = vst.msk [vmem:[%s184 + $0x28] sm:$0xff] %vm780, %v906
      %915 = vst.msk [vmem:[%s184 + $0x30] sm:$0xff] %vm780, %v907
      %916 = vst.msk [vmem:[%s184 + $0x38] sm:$0xff] %vm780, %v908
      %s917 = smul.u32 8, %s18
      %p918 = scmp.lt.s32.totalorder %s17, 1
      %s919 = scalar_select %p918, %s17, 1
      %p920 = scmp.lt.s32.totalorder %s917, 7
      %s921 = scalar_select %p920, %s917, 7
      %s922 = smul.addr %s919, 8
      %s923 = sadd.s32 %s921, %s922
      %s924 = smul.addr %s923, 8
      %s925 = scalar_lea.vmem %s2, %s924
      // Predicated region
      $region29: #{encoder_conv_forward.1} parent=27 // pred_check
        %p926 = pneg %p94
      $region30: #{encoder_conv_forward.1} parent=27 // pred_check_branch
        %928 = sbr.rel (%p926) target = $region32
      $region31: #{encoder_conv_forward.1} parent=27 // pred_region
        %s929 = smul.u32 8, %s18
      $region32: #{encoder_conv_forward.1} parent=27 // pred_fallthru
        _
    $region28: #{encoder_conv_forward.1} parent=5 // pred_fallthru
      _
    %p930 = scmp.le.s32.totalorder 2, %s8
    // Predicated region
    $region33: #{encoder_conv_forward.1} parent=5 // pred_check
      %p931 = pneg %p930
    $region34: #{encoder_conv_forward.1} parent=5 // pred_check_branch
      %933 = sbr.rel (%p931) target = $region36
    $region35: #{encoder_conv_forward.1} parent=5 // pred_region
      %s934 = ssub.s32 %s8, 2
      // Predicated region
      $region37: #{encoder_conv_forward.1} parent=35 // pred_check
        %p935 = pneg %p100
      $region38: #{encoder_conv_forward.1} parent=35 // pred_check_branch
        %937 = sbr.rel (%p935) target = $region40
      $region39: #{encoder_conv_forward.1} parent=35 // pred_region
        %s938 = smul.u32 8, %s20
        %p939 = scmp.lt.s32.totalorder %s19, 1
        %s940 = scalar_select %p939, %s19, 1
        %p941 = scmp.lt.s32.totalorder %s938, 7
        %s942 = scalar_select %p941, %s938, 7
        %s943 = smul.addr %s940, 8
        %s944 = sadd.s32 %s942, %s943
        %s945 = smul.addr %s944, 8
        %s946 = scalar_lea.vmem %s2, %s945
      $region40: #{encoder_conv_forward.1} parent=35 // pred_fallthru
        _
    $region36: #{encoder_conv_forward.1} parent=5 // pred_fallthru
      _
  $region6: #{encoder_conv_forward.1} parent=0 // loop_footer
    %s12 = sadd.s32 1, %s8
  $region7: #{encoder_conv_forward.1} parent=0 // loop_footer_branch
    %7 = sbr.rel target = $region3
  $region8: #{encoder_conv_forward.1} parent=0 // loop_exit
    _

</llo_original>
